<compile_context>
chip_gen: v6e
topology: v6e:2x2x1
jax: 0.10.0
libtpu: 0.0.40
codegen_flags: <defaults>
</compile_context>

<pallas_src>
import functools

import jax
import jax.numpy as jnp
from jax.experimental import pallas as pl
from jax.experimental.pallas import tpu as pltpu


def _onehot_embed_kernel(t_ref, out_ref, *, num_channels: int, groups: int):
    """One grid step.

    t_ref:   (TB, groups)               float32 -- `groups` consecutive timesteps per row
    out_ref: (TB, groups*num_channels)  out_dtype -- lane-dense packed embeddings
    """
    C = num_channels
    k = groups
    tb, L = out_ref.shape

    # Channel index per lane (the registered `indices` buffer, regenerated in-register).
    lane = jax.lax.broadcasted_iota(jnp.int32, (tb, L), 1)
    idx = (lane % C).astype(jnp.float32)

    # Scale all k timesteps once (tiny (tb, k) op), then spread each group's
    # scalar across its C lanes with an ascending boundary-select chain:
    # group g owns lanes [g*C, (g+1)*C); later selects overwrite earlier ones,
    # so k-1 compare+select pairs suffice.  Pure VPU filler under the store
    # bottleneck.  For k == 1 the (tb, 1) value simply broadcasts below.
    t_scaled = t_ref[...] * jnp.float32(C - 1)            # (tb, k)
    ind_full = t_scaled[:, 0:1]                           # (tb, 1)
    for g in range(1, k):
        ind_full = jnp.where(lane >= g * C, t_scaled[:, g:g + 1], ind_full)

    out = jnp.maximum(1.0 - jnp.abs(ind_full - idx), 0.0)
    out_ref[...] = out.astype(out_ref.dtype)


# ~2 MiB per output buffer (Pallas double-buffers it) -> comfortably inside the
# default scoped VMEM on v5e (16 MiB) and v6e/v7x (32 MiB), and big enough to sit
# near the measured HBM-roofline plateau for tiled streaming kernels.
_VMEM_TILE_BYTES = 2 * 1024 * 1024


def one_hot_embedding(t: jax.Array, num_channels: int,
                      out_dtype=jnp.float32) -> jax.Array:
    """t: (B, 1) or (B,) float -> (B, num_channels) embedding."""
    C = int(num_channels)
    t = jnp.asarray(t, jnp.float32)
    if t.ndim == 1:
        t = t[:, None]
    B = t.shape[0]

    # Lane packing factor: fold k consecutive batch rows into one slab row so the
    # output last dim is >= 128 lanes even for narrow channel counts.  For the
    # common power-of-two C this makes L an exact multiple of 128 (fully dense
    # unmasked stores).
    k = 1 if C >= 128 else -(-128 // C)
    B_pad = -(-B // k) * k
    if B_pad != B:
        t = jnp.pad(t, ((0, B_pad - B), (0, 0)))
    Bs = B_pad // k                      # slab rows
    L = k * C                            # slab lane width
    t_slab = t.reshape(Bs, k)            # row-major -> free relayout

    # Batch tile: ~2 MiB of output per buffer, multiple of 8 sublanes.
    row_bytes = L * jnp.dtype(out_dtype).itemsize
    tb = max(8, (_VMEM_TILE_BYTES // row_bytes) // 8 * 8)
    if tb >= Bs:
        tb = Bs                          # single block == full array dims (always legal)
    grid = (pl.cdiv(Bs, tb),)

    kernel = functools.partial(_onehot_embed_kernel, num_channels=C, groups=k)
    out_slab = pl.pallas_call(
        kernel,
        out_shape=jax.ShapeDtypeStruct((Bs, L), out_dtype),
        grid=grid,
        in_specs=[pl.BlockSpec((tb, k), lambda i: (i, 0))],
        out_specs=pl.BlockSpec((tb, L), lambda i: (i, 0)),
        compiler_params=pltpu.CompilerParams(
            dimension_semantics=("parallel",)),   # shards batch across v7x's 2 TCs
    )(t_slab)

    out = out_slab.reshape(B_pad, C)     # row-major -> free relayout
    if B_pad != B:
        out = out[:B]
    return out


def _reference(t: jax.Array, num_channels: int) -> jax.Array:
    indices = jnp.arange(num_channels, dtype=jnp.float32)[None, :]
    ind = jnp.asarray(t, jnp.float32).reshape(-1, 1) * (num_channels - 1)
    return jnp.clip(1.0 - jnp.abs(ind - indices), 0.0)


if __name__ == "__main__":
    # Primary demo: B=8 timesteps, 32 channels (k=4 lane packing, fully dense stores).
    B, C = 8, 32
    t = jax.random.uniform(jax.random.PRNGKey(0), (B, 1), dtype=jnp.float32)
    out = jax.block_until_ready(one_hot_embedding(t, C))
    assert out.shape == (B, C) and out.dtype == jnp.float32
    assert jnp.allclose(out, _reference(t, C), atol=1e-6), "mismatch vs reference (packed path)"

    # Small channel count (long select chain, heavy packing: k=32).
    B1, C1 = 2, 4
    t1 = jax.random.uniform(jax.random.PRNGKey(3), (B1, 1), dtype=jnp.float32)
    out1 = jax.block_until_ready(one_hot_embedding(t1, C1))
    assert out1.shape == (B1, C1)
    assert jnp.allclose(out1, _reference(t1, C1), atol=1e-6), "mismatch vs reference (small-C path)"

    # Batch not divisible by the packing factor (padding path).
    B2, C2 = 6, 32
    t2 = jax.random.uniform(jax.random.PRNGKey(1), (B2, 1), dtype=jnp.float32)
    out2 = jax.block_until_ready(one_hot_embedding(t2, C2))
    assert out2.shape == (B2, C2)
    assert jnp.allclose(out2, _reference(t2, C2), atol=1e-6), "mismatch vs reference (padded path)"

    # Wide-channel path (C >= 128, no packing).
    B3, C3 = 8, 160
    t3 = jax.random.uniform(jax.random.PRNGKey(2), (B3, 1), dtype=jnp.float32)
    out3 = jax.block_until_ready(one_hot_embedding(t3, C3))
    assert out3.shape == (B3, C3)
    assert jnp.allclose(out3, _reference(t3, C3), atol=1e-6), "mismatch vs reference (wide path)"

    print("KERNEL_OK")
</pallas_src>

<mosaic_0001>
module attributes {stable_mosaic.version = 11 : i64} {
  func.func @_onehot_embed_kernel(%arg0: i32, %arg1: memref<2x4xf32, #tpu.memory_space<vmem>>, %arg2: memref<2x128xf32, #tpu.memory_space<vmem>>) attributes {dimension_semantics = [#tpu.dimension_semantics<parallel>], iteration_bounds = array<i64: 1>, scalar_prefetch = 0 : i64, scratch_operands = 0 : i64, tpu.core_type = #tpu.core_type<tc>, window_params = [{transform_indices = @transform_0, window_bounds = array<i64: 2, 4>}, {transform_indices = @transform_1, window_bounds = array<i64: 2, 128>}]} {
    %0 = tpu.iota {dimensions = array<i32: 1>} : vector<2x128xi32>
    %c32_i32 = arith.constant 32 : i32
    %c0_i32 = arith.constant 0 : i32
    %1 = arith.cmpi eq, %c32_i32, %c0_i32 : i32
    %c1_i32 = arith.constant 1 : i32
    %2 = arith.select %1, %c1_i32, %c32_i32 : i32
    %3 = vector.broadcast %2 : i32 to vector<2x128xi32>
    %4 = arith.remsi %0, %3 : vector<2x128xi32>
    %c0_i32_0 = arith.constant 0 : i32
    %5 = vector.broadcast %c0_i32_0 : i32 to vector<2x128xi32>
    %6 = arith.cmpi ne, %4, %5 : vector<2x128xi32>
    %c0_i32_1 = arith.constant 0 : i32
    %7 = vector.broadcast %c0_i32_1 : i32 to vector<2x128xi32>
    %8 = arith.cmpi slt, %4, %7 : vector<2x128xi32>
    %c0_i32_2 = arith.constant 0 : i32
    %9 = arith.cmpi slt, %2, %c0_i32_2 : i32
    %10 = vector.broadcast %9 : i1 to vector<2x128xi1>
    %11 = vector.broadcast %10 : vector<2x128xi1> to vector<2x128xi1>
    %12 = arith.xori %8, %11 : vector<2x128xi1>
    %13 = arith.andi %12, %6 : vector<2x128xi1>
    %14 = vector.broadcast %2 : i32 to vector<2x128xi32>
    %15 = arith.addi %4, %14 : vector<2x128xi32>
    %16 = arith.select %13, %15, %4 : vector<2x128xi1>, vector<2x128xi32>
    %17 = arith.sitofp %16 : vector<2x128xi32> to vector<2x128xf32>
    %c0 = arith.constant 0 : index
    %c0_3 = arith.constant 0 : index
    %18 = vector.load %arg1[%c0, %c0_3] : memref<2x4xf32, #tpu.memory_space<vmem>>, vector<2x4xf32>
    %cst = arith.constant 3.100000e+01 : f32
    %19 = vector.broadcast %cst : f32 to vector<2x4xf32>
    %20 = arith.mulf %18, %19 : vector<2x4xf32>
    %21 = vector.extract_strided_slice %20 {offsets = [0, 0], sizes = [2, 1], strides = [1, 1]} : vector<2x4xf32> to vector<2x1xf32>
    %c32_i32_4 = arith.constant 32 : i32
    %22 = vector.broadcast %c32_i32_4 : i32 to vector<2x128xi32>
    %23 = arith.cmpi sge, %0, %22 : vector<2x128xi32>
    %24 = vector.extract_strided_slice %20 {offsets = [0, 1], sizes = [2, 1], strides = [1, 1]} : vector<2x4xf32> to vector<2x1xf32>
    %25 = vector.shape_cast %24 : vector<2x1xf32> to vector<2x1xf32>
    %26 = vector.broadcast %25 : vector<2x1xf32> to vector<2x128xf32>
    %27 = vector.shape_cast %21 : vector<2x1xf32> to vector<2x1xf32>
    %28 = vector.broadcast %27 : vector<2x1xf32> to vector<2x128xf32>
    %29 = arith.select %23, %26, %28 : vector<2x128xi1>, vector<2x128xf32>
    %c64_i32 = arith.constant 64 : i32
    %30 = vector.broadcast %c64_i32 : i32 to vector<2x128xi32>
    %31 = arith.cmpi sge, %0, %30 : vector<2x128xi32>
    %32 = vector.extract_strided_slice %20 {offsets = [0, 2], sizes = [2, 1], strides = [1, 1]} : vector<2x4xf32> to vector<2x1xf32>
    %33 = vector.shape_cast %32 : vector<2x1xf32> to vector<2x1xf32>
    %34 = vector.broadcast %33 : vector<2x1xf32> to vector<2x128xf32>
    %35 = arith.select %31, %34, %29 : vector<2x128xi1>, vector<2x128xf32>
    %c96_i32 = arith.constant 96 : i32
    %36 = vector.broadcast %c96_i32 : i32 to vector<2x128xi32>
    %37 = arith.cmpi sge, %0, %36 : vector<2x128xi32>
    %38 = vector.extract_strided_slice %20 {offsets = [0, 3], sizes = [2, 1], strides = [1, 1]} : vector<2x4xf32> to vector<2x1xf32>
    %39 = vector.shape_cast %38 : vector<2x1xf32> to vector<2x1xf32>
    %40 = vector.broadcast %39 : vector<2x1xf32> to vector<2x128xf32>
    %41 = arith.select %37, %40, %35 : vector<2x128xi1>, vector<2x128xf32>
    %42 = arith.subf %41, %17 : vector<2x128xf32>
    %43 = math.absf %42 : vector<2x128xf32>
    %cst_5 = arith.constant 1.000000e+00 : f32
    %44 = vector.broadcast %cst_5 : f32 to vector<2x128xf32>
    %45 = arith.subf %44, %43 : vector<2x128xf32>
    %cst_6 = arith.constant 0.000000e+00 : f32
    %46 = vector.broadcast %cst_6 : f32 to vector<2x128xf32>
    %47 = arith.maximumf %45, %46 : vector<2x128xf32>
    %c0_7 = arith.constant 0 : index
    %c0_8 = arith.constant 0 : index
    %48 = vector.load %arg2[%c0_7, %c0_8] : memref<2x128xf32, #tpu.memory_space<vmem>>, vector<2x128xf32>
    tpu.vector_store %arg2[%c0_7, %c0_8], %47 {strides = array<i32>} : memref<2x128xf32, #tpu.memory_space<vmem>>, vector<2x128xf32>,
    return
  }
  func.func @transform_0(%arg0: i32) -> (i32, i32) {
    %c0_i32 = arith.constant 0 : i32
    %c0_i32_0 = arith.constant 0 : i32
    return %arg0, %c0_i32 : i32, i32
  }
  func.func @transform_1(%arg0: i32) -> (i32, i32) {
    %c0_i32 = arith.constant 0 : i32
    %c0_i32_0 = arith.constant 0 : i32
    return %arg0, %c0_i32 : i32, i32
  }
}

</mosaic_0001>

<llo_original>
// kernel: tpu_custom_call.1
$region0: #{tpu_custom_call.1}
  #allocation0 [shape = 'u32[]', space=smem, size = 0x4, offset = 0x4, fixed_abs, tag = 'smem constant byte address 0x4 - core index']
  #allocation1 [shape = 'u32[144,128]{1,0:T(1,128)}', space=vmem, size = 0x12000, scoped, tag = 'internal scratch']
  %s0 = inlined_call_operand.hbm [shape: f32[2,4], index: 0, kind: input, shape index: {}]
  %s1 = inlined_call_operand.hbm [shape: f32[2,128], index: 1, kind: output, shape index: {}]
  %s2 = sld [smem:[#allocation0]]
  $region18: #{tpu_custom_call.1} parent=0
    _
  %s4 = ssub.s32 1, %s2
  %s5 = scalar_select 0, %s4, %s2
  $region1: #{tpu_custom_call.1} parent=0
    #allocation2 [shape = 'u8[1024]{0}', space=vmem, size = 0x400, scoped, tag = 'input window, operand 0, single buffered']
    #allocation3 [shape = 's32[1]{0}', space=sflag, size = 0x4, scoped, tag = 'scoped memory for tpu_custom_call.1']
    #allocation4 [shape = 's32[1]{0}', space=sflag, size = 0x4, scoped, tag = 'scoped memory for tpu_custom_call.1']
    #allocation5 [shape = 'u8[1024]{0}', space=vmem, size = 0x400, scoped, tag = 'output window, operand 0, single buffered']
    %6 = vsyncpa [#allocation3], 0
    %7 = vsyncpa [#allocation4], 0
    // Predicated region
    $region2: #{tpu_custom_call.1} parent=1 // pred_check
      _
    $region3: #{tpu_custom_call.1} parent=1 // pred_check_branch
      %9 = sbr.rel (0) target = $region5
    $region4: #{tpu_custom_call.1} parent=1 // pred_region
      %s11 = ssub.s32 32, 32
      %12 = vsyncadd [#allocation3], %s11
      %s14 = sshll.u32 [#allocation2], 4
      %s15 = int_to_ptr.vmem [resolvable:$true] %s14
      %17 = dma.hbm_to_vmem [thread:$0]  %s0, 32, %s15, [#allocation3]
    $region5: #{tpu_custom_call.1} parent=1 // pred_fallthru
      _
    // Predicated region
    $region6: #{tpu_custom_call.1} parent=1 // pred_check
      _
    $region7: #{tpu_custom_call.1} parent=1 // pred_check_branch
      %19 = sbr.rel (0) target = $region9
    $region8: #{tpu_custom_call.1} parent=1 // pred_region
      %20 = dma.done [#allocation3], 32
    $region9: #{tpu_custom_call.1} parent=1 // pred_fallthru
      _
    %v21 = vlaneseq
    %v22 = vand.u32 %v21, 127
    %vm23 = vcmp.lt.s32.totalorder %v22, 0
    %v24 = vsub.s32 0, %v22
    %v25 = vsel %vm23, %v24, %v22
    %v26 = vshrl.u32 %v25, 5
    %v27 = vand.u32 %v25, 31
    %v28 = vsub.s32 0, %v27
    %v29 = vsel %vm23, %v28, %v27
    %vm30 = vcmp.ne.s32.totalorder %v29, 0
    %vm31 = vcmp.lt.s32.totalorder %v29, 0
    %vm32 = vmand %vm31, %vm30
    %v33 = vadd.s32 %v29, 32
    %v34 = vsel %vm32, %v33, %v29
    %v35 = vcvt.s32.f32 %v34
    %v36 = vld [vmem:[#allocation2] sm:$0x3]
    %v37 = vmul.f32 %v36, 31.0
    %vm38 = vcmp.ge.s32.totalorder %v22, 32
    %40 = vset.pattern.permute.xlu0 1
    %41 = vperm.xlu0 %40, %v37
    %v42 = vpop.permute.xlu0 %41
    %44 = vset.pattern.permute.xlu0 0
    %45 = vperm.xlu0 %44, %v37
    %v46 = vpop.permute.xlu0 %45
    %v48 = vsel %vm38, %v42, %v46
    %vm49 = vcmp.ge.s32.totalorder %v22, 64
    %50 = vset.pattern.permute.xlu0 2
    %51 = vperm.xlu0 %50, %v37
    %v52 = vpop.permute.xlu0 %51
    %v54 = vsel %vm49, %v52, %v48
    %vm55 = vcmp.ge.s32.totalorder %v22, 96
    %56 = vset.pattern.permute.xlu0 3
    %57 = vperm.xlu0 %56, %v37
    %v58 = vpop.permute.xlu0 %57
    %v60 = vsel %vm55, %v58, %v54
    %v61 = vsub.f32 %v60, %v35
    %v62 = vand.u32 2147483647, %v61
    %v63 = vsub.f32 1.0, %v62
    %v64 = vmax.f32 %v63, 0.0
    %65 = vst [vmem:[#allocation5] sm:$0x3] %v64
    // Predicated region
    $region10: #{tpu_custom_call.1} parent=1 // pred_check
      _
    $region11: #{tpu_custom_call.1} parent=1 // pred_check_branch
      %67 = sbr.rel (0) target = $region13
    $region12: #{tpu_custom_call.1} parent=1 // pred_region
      %s69 = ssub.s32 32, 32
      %70 = vsyncadd [#allocation4], %s69
      %s72 = sshll.u32 [#allocation5], 4
      %s73 = int_to_ptr.vmem [resolvable:$true] %s72
      %75 = dma.vmem_to_hbm [thread:$0]  %s73, 32, %s1, [#allocation4]
    $region13: #{tpu_custom_call.1} parent=1 // pred_fallthru
      _
    // Predicated region
    $region14: #{tpu_custom_call.1} parent=1 // pred_check
      _
    $region15: #{tpu_custom_call.1} parent=1 // pred_check_branch
      %77 = sbr.rel (0) target = $region17
    $region16: #{tpu_custom_call.1} parent=1 // pred_region
      %78 = dma.done [#allocation4], 32
    $region17: #{tpu_custom_call.1} parent=1 // pred_fallthru
      _
    %79 = vsyncpa [#allocation3], 1
    %80 = vsyncpa [#allocation4], 1

</llo_original>
